<compile_context>
chip_gen: v6e
topology: v6e:2x2x1
jax: 0.10.0
libtpu: 0.0.40
codegen_flags: <defaults>
</compile_context>

<pallas_src>
import functools

import jax
import jax.numpy as jnp
from jax.experimental import pallas as pl
from jax.experimental.pallas import tpu as pltpu

_BASE_CANDIDATES = (512, 256)   # padding granularities; never 128 -> no tile cliff
_PAD_OVERHEAD_CAP = 1.10        # allow at most ~10% extra A traffic from padding


def _round_up(n, m):
    return ((n + m - 1) // m) * m


def _tpu_config():
    """Generation-gated tiling / VMEM budget."""
    kind = ""
    try:
        kind = jax.devices()[0].device_kind.lower()
    except Exception:
        pass
    if "v5" in kind or "v6" in kind:
        # 128 MiB physical VMEM, single TensorCore per chip.
        return dict(max_tm=2048, max_tk=2048,
                    vmem_limit=100 * 1024 * 1024, even_row_tiles=False)
    # v7x (and unknown, conservative): 64 MiB VMEM, 2 TensorCores.
    return dict(max_tm=1024, max_tk=2048,
                vmem_limit=48 * 1024 * 1024, even_row_tiles=True)


def _choose_tiling(n, max_tm, max_tk, even_row_tiles):
    """Returns (n_pad, tm, tk); tiles never fall below 256."""
    if n <= min(max_tm, max_tk):
        return n, n, n                     # single block == full array, no padding
    base = _BASE_CANDIDATES[-1]
    for b in _BASE_CANDIDATES:
        if _round_up(n, b) ** 2 <= _PAD_OVERHEAD_CAP * n * n:
            base = b
            break
    n_pad = _round_up(n, base)

    def _largest(cap):
        best = base
        t = base
        lim = min(cap, n_pad)
        while t <= lim:
            if n_pad % t == 0:
                best = t
            t += base
        return best

    tk = _largest(max_tk)
    tm = _largest(max_tm)
    if even_row_tiles and n_pad // tm > 1 and (n_pad // tm) % 2 == 1:
        # v7x: prefer an even row-tile count so the 2 TensorCores split evenly.
        even = [t for t in range(base, min(max_tm, n_pad) + 1, base)
                if n_pad % t == 0 and (n_pad // t) % 2 == 0]
        if even:
            tm = max(even)
        elif tm % 512 == 0:
            tm //= 2                      # still >= 256 rows, count becomes even
    return n_pad, tm, tk


# ---------------------------------------------------------------------------
# Pass 1:  H = ReLU((A @ X) @ W1 + b1)      (streams A once; X VMEM-resident)
# ---------------------------------------------------------------------------
def _gcn_pass1_kernel(adj_ref, x_ref, w1_ref, b1_ref, h_ref, acc_ref, *, tk):
    k = pl.program_id(1)

    @pl.when(k == 0)
    def _():
        acc_ref[...] = jnp.zeros_like(acc_ref)

    row0 = pl.multiple_of(k * tk, tk)
    x_blk = x_ref[pl.ds(row0, tk), :]                     # (tk, f_in), resident
    acc_ref[...] += jnp.dot(adj_ref[...], x_blk,
                            preferred_element_type=jnp.float32)

    @pl.when(k == pl.num_programs(1) - 1)
    def _():
        h = jnp.dot(acc_ref[...], w1_ref[...],
                    preferred_element_type=jnp.float32) + b1_ref[...]
        h = jnp.maximum(h, 0.0)            # ReLU; dropout = identity (eval mode)
        h_ref[...] = h.astype(h_ref.dtype)                # narrow (h_dim) intermediate


# ---------------------------------------------------------------------------
# Pass 2:  out = log_softmax((A @ H) @ W2 + b2)   (streams A once; H resident)
# ---------------------------------------------------------------------------
def _gcn_pass2_kernel(adj_ref, h_ref, w2_ref, b2_ref, o_ref, acc_ref, *, tk, f_out):
    k = pl.program_id(1)

    @pl.when(k == 0)
    def _():
        acc_ref[...] = jnp.zeros_like(acc_ref)

    row0 = pl.multiple_of(k * tk, tk)
    h_blk = h_ref[pl.ds(row0, tk), :]                     # (tk, h_dim), resident
    acc_ref[...] += jnp.dot(adj_ref[...], h_blk,
                            preferred_element_type=jnp.float32)

    @pl.when(k == pl.num_programs(1) - 1)
    def _():
        y = jnp.dot(acc_ref[...], w2_ref[...],
                    preferred_element_type=jnp.float32) + b2_ref[...]
        # Mask the zero-padded lanes so they cannot perturb the softmax.
        col = jax.lax.broadcasted_iota(jnp.int32, y.shape, 1)
        y = jnp.where(col < f_out, y, -1e30)
        m = jnp.max(y, axis=-1, keepdims=True)
        z = y - m
        lse = jnp.log(jnp.sum(jnp.exp(z), axis=-1, keepdims=True))   # EUP slot
        o_ref[...] = (z - lse).astype(o_ref.dtype)        # lane-dense 128-wide store


def prepare_adjacency(adj, compute_dtype=jnp.bfloat16, *, config=None):
    """Cast (and pad) A once per graph; amortized over repeated forwards the
    bf16 stream halves the dominant HBM traffic.  For a single forward, pass
    the f32 adjacency directly instead (the standalone cast costs more HBM
    traffic than it saves)."""
    cfg = config or _tpu_config()
    n = adj.shape[0]
    n_pad, _, _ = _choose_tiling(n, cfg["max_tm"], cfg["max_tk"],
                                 cfg["even_row_tiles"])
    adj = adj.astype(compute_dtype)
    if n_pad != n:
        adj = jnp.pad(adj, ((0, n_pad - n), (0, n_pad - n)))
    return adj


def gcn_forward(x, adj, w1, b1, w2, b2, *, config=None):
    cfg = config or _tpu_config()
    N, f_in = x.shape
    h_dim = w1.shape[1]
    f_out = w2.shape[1]

    compute_dtype = adj.dtype                 # stream A in whatever it was given
    adj_bytes = jnp.dtype(compute_dtype).itemsize

    n_pad, tm, tk = _choose_tiling(N, cfg["max_tm"], cfg["max_tk"],
                                   cfg["even_row_tiles"])
    assert adj.shape[0] == adj.shape[1] and adj.shape[0] in (N, n_pad)
    if adj.shape[0] != n_pad:
        # One-off cost; prefer prepare_adjacency() once per graph when reusing A.
        adj = jnp.pad(adj, ((0, n_pad - N), (0, n_pad - N)))

    x_c = x.astype(compute_dtype)
    if n_pad != N:
        x_c = jnp.pad(x_c, ((0, n_pad - N), (0, 0)))

    grid = (n_pad // tm, n_pad // tk)

    # Pad narrow output features to a full 128-lane slab (lane-dense stores).
    f_pad = max(128, _round_up(f_out, 128))
    w1f = w1.astype(jnp.float32)
    b1_2d = b1.astype(jnp.float32).reshape(1, -1)
    w2p = jnp.pad(w2.astype(jnp.float32), ((0, 0), (0, f_pad - f_out)))
    b2p = jnp.pad(b2.astype(jnp.float32).reshape(1, -1),
                  ((0, 0), (0, f_pad - f_out)))

    cparams = pltpu.CompilerParams(
        dimension_semantics=("parallel", "arbitrary"),
        vmem_limit_bytes=cfg["vmem_limit"],
    )

    # ---------------- Pass 1 ----------------
    h = pl.pallas_call(
        functools.partial(_gcn_pass1_kernel, tk=tk),
        out_shape=jax.ShapeDtypeStruct((n_pad, h_dim), compute_dtype),
        grid_spec=pltpu.PrefetchScalarGridSpec(
            num_scalar_prefetch=0,
            grid=grid,
            in_specs=[
                pl.BlockSpec((tm, tk), lambda i, k: (i, k)),        # A tile (streamed)
                pl.BlockSpec((n_pad, f_in), lambda i, k: (0, 0)),   # X (VMEM-resident)
                pl.BlockSpec((f_in, h_dim), lambda i, k: (0, 0)),   # W1 (resident)
                pl.BlockSpec((1, h_dim), lambda i, k: (0, 0)),      # b1 (resident)
            ],
            out_specs=pl.BlockSpec((tm, h_dim), lambda i, k: (i, 0)),
            scratch_shapes=[pltpu.VMEM((tm, f_in), jnp.float32)],
        ),
        compiler_params=cparams,
        cost_estimate=pl.CostEstimate(
            flops=2 * n_pad * n_pad * f_in + 2 * n_pad * f_in * h_dim,
            transcendentals=0,
            bytes_accessed=n_pad * n_pad * adj_bytes
                           + n_pad * f_in * adj_bytes
                           + n_pad * h_dim * adj_bytes,
        ),
    )(adj, x_c, w1f, b1_2d)

    # ---------------- Pass 2 ----------------
    out_padded = pl.pallas_call(
        functools.partial(_gcn_pass2_kernel, tk=tk, f_out=f_out),
        out_shape=jax.ShapeDtypeStruct((n_pad, f_pad), jnp.float32),
        grid_spec=pltpu.PrefetchScalarGridSpec(
            num_scalar_prefetch=0,
            grid=grid,
            in_specs=[
                pl.BlockSpec((tm, tk), lambda i, k: (i, k)),        # A tile (streamed)
                pl.BlockSpec((n_pad, h_dim), lambda i, k: (0, 0)),  # H (VMEM-resident)
                pl.BlockSpec((h_dim, f_pad), lambda i, k: (0, 0)),  # W2 padded
                pl.BlockSpec((1, f_pad), lambda i, k: (0, 0)),      # b2 padded
            ],
            out_specs=pl.BlockSpec((tm, f_pad), lambda i, k: (i, 0)),
            scratch_shapes=[pltpu.VMEM((tm, h_dim), jnp.float32)],
        ),
        compiler_params=cparams,
        cost_estimate=pl.CostEstimate(
            flops=2 * n_pad * n_pad * h_dim + 2 * n_pad * h_dim * f_pad,
            transcendentals=n_pad * (f_pad + 1),
            bytes_accessed=n_pad * n_pad * adj_bytes
                           + n_pad * h_dim * adj_bytes
                           + n_pad * f_pad * 4,
        ),
    )(adj, h, w2p, b2p)

    return out_padded[:N, :f_out]


if __name__ == "__main__":
    # Small, module-consistent shapes.
    N = 64          # number of graph nodes
    input_dim = 16
    hidden_dim = 32
    output_dim = 8

    key = jax.random.PRNGKey(0)
    kx, ka = jax.random.split(key)

    x = jax.random.normal(kx, (N, input_dim), dtype=jnp.float32)
    # Deterministic dense "adjacency": random nonneg matrix, row-normalized.
    adj_raw = jax.random.uniform(ka, (N, N), dtype=jnp.float32)
    adj = adj_raw / jnp.sum(adj_raw, axis=1, keepdims=True)

    # Parameters: torch.nn.init.ones_ on both kernels and biases.
    w1 = jnp.ones((input_dim, hidden_dim), dtype=jnp.float32)
    b1 = jnp.ones((hidden_dim,), dtype=jnp.float32)
    w2 = jnp.ones((hidden_dim, output_dim), dtype=jnp.float32)
    b2 = jnp.ones((output_dim,), dtype=jnp.float32)

    # Adjacency prepared (cast/pad) ONCE per graph, outside the forward path.
    adj_c = prepare_adjacency(adj, jnp.bfloat16)

    out = gcn_forward(x, adj_c, w1, b1, w2, b2)
    jax.block_until_ready(out)

    # Pure-JAX f32 reference of the module's eval forward.
    h_ref = jnp.maximum(adj @ (x @ w1) + b1, 0.0)
    y_ref = adj @ (h_ref @ w2) + b2
    ref = jax.nn.log_softmax(y_ref, axis=1)

    assert out.shape == (N, output_dim)
    assert bool(jnp.all(jnp.isfinite(out)))
    row_sums = jnp.exp(out).sum(axis=1)
    assert bool(jnp.allclose(row_sums, 1.0, atol=1e-5))
    # bf16 adjacency stream -> loose-ish tolerance vs the f32 reference.
    assert bool(jnp.allclose(out, ref, atol=2e-2)), float(jnp.max(jnp.abs(out - ref)))

    print("KERNEL_OK")
</pallas_src>

<mosaic_0001>
module attributes {stable_mosaic.version = 11 : i64} {
  func.func @_gcn_pass1_kernel(%arg0: i32, %arg1: i32, %arg2: memref<64x64xbf16, #tpu.memory_space<vmem>>, %arg3: memref<64x16xbf16, #tpu.memory_space<vmem>>, %arg4: memref<16x32xf32, #tpu.memory_space<vmem>>, %arg5: memref<1x32xf32, #tpu.memory_space<vmem>>, %arg6: memref<64x32xbf16, #tpu.memory_space<vmem>>, %arg7: memref<64x16xf32, #tpu.memory_space<vmem>>) attributes {dimension_semantics = [#tpu.dimension_semantics<parallel>, #tpu.dimension_semantics<arbitrary>], iteration_bounds = array<i64: 1, 1>, scalar_prefetch = 0 : i64, scratch_operands = 1 : i64, tpu.core_type = #tpu.core_type<tc>, window_params = [{transform_indices = @transform_0, window_bounds = array<i64: 64, 64>}, {pipeline_mode = #tpu.pipeline_mode<synchronous>, transform_indices = @transform_1, window_bounds = array<i64: 64, 16>}, {pipeline_mode = #tpu.pipeline_mode<synchronous>, transform_indices = @transform_2, window_bounds = array<i64: 16, 32>}, {pipeline_mode = #tpu.pipeline_mode<synchronous>, transform_indices = @transform_3, window_bounds = array<i64: 1, 32>}, {transform_indices = @transform_4, window_bounds = array<i64: 64, 32>}]} {
    %c0_i32 = arith.constant 0 : i32
    %0 = arith.cmpi eq, %arg1, %c0_i32 : i32
    %1 = arith.extui %0 : i1 to i32
    %c0_i32_0 = arith.constant 0 : i32
    %2 = arith.cmpi ne, %1, %c0_i32_0 : i32
    scf.if %2 {
      %cst_9 = arith.constant 0.000000e+00 : f32
      %15 = vector.broadcast %cst_9 : f32 to vector<64x16xf32>
      %c0_10 = arith.constant 0 : index
      %c0_11 = arith.constant 0 : index
      %16 = vector.load %arg7[%c0_10, %c0_11] : memref<64x16xf32, #tpu.memory_space<vmem>>, vector<64x16xf32>
      tpu.vector_store %arg7[%c0_10, %c0_11], %15 {strides = array<i32>} : memref<64x16xf32, #tpu.memory_space<vmem>>, vector<64x16xf32>,
    } else {
    }
    %c64_i32 = arith.constant 64 : i32
    %3 = arith.muli %arg1, %c64_i32 : i32
    %4 = tpu.assume_multiple %3, 64 : i32
    %5 = arith.index_cast %4 : i32 to index
    %c0 = arith.constant 0 : index
    %6 = vector.load %arg3[%5, %c0] : memref<64x16xbf16, #tpu.memory_space<vmem>>, vector<64x16xbf16>
    %c0_1 = arith.constant 0 : index
    %c0_2 = arith.constant 0 : index
    %7 = vector.load %arg7[%c0_1, %c0_2] : memref<64x16xf32, #tpu.memory_space<vmem>>, vector<64x16xf32>
    %c0_3 = arith.constant 0 : index
    %c0_4 = arith.constant 0 : index
    %8 = vector.load %arg2[%c0_3, %c0_4] : memref<64x64xbf16, #tpu.memory_space<vmem>>, vector<64x64xbf16>
    %cst = arith.constant dense<0.000000e+00> : vector<64x16xf32>
    %9 = tpu.matmul %8, %6, %cst {dimension_numbers = #tpu.dot_dimension_numbers<[1], [0], [0], [1], [0, 0, 1, 1], [], []>} : vector<64x64xbf16>, vector<64x16xbf16>, vector<64x16xf32> -> vector<64x16xf32>
    %10 = arith.addf %7, %9 : vector<64x16xf32>
    %c0_5 = arith.constant 0 : index
    %c0_6 = arith.constant 0 : index
    %11 = vector.load %arg7[%c0_5, %c0_6] : memref<64x16xf32, #tpu.memory_space<vmem>>, vector<64x16xf32>
    tpu.vector_store %arg7[%c0_5, %c0_6], %10 {strides = array<i32>} : memref<64x16xf32, #tpu.memory_space<vmem>>, vector<64x16xf32>,
    %c0_i32_7 = arith.constant 0 : i32
    %12 = arith.cmpi eq, %arg1, %c0_i32_7 : i32
    %13 = arith.extui %12 : i1 to i32
    %c0_i32_8 = arith.constant 0 : i32
    %14 = arith.cmpi ne, %13, %c0_i32_8 : i32
    scf.if %14 {
      %c0_9 = arith.constant 0 : index
      %c0_10 = arith.constant 0 : index
      %15 = vector.load %arg7[%c0_9, %c0_10] : memref<64x16xf32, #tpu.memory_space<vmem>>, vector<64x16xf32>
      %c0_11 = arith.constant 0 : index
      %c0_12 = arith.constant 0 : index
      %16 = vector.load %arg4[%c0_11, %c0_12] : memref<16x32xf32, #tpu.memory_space<vmem>>, vector<16x32xf32>
      %cst_13 = arith.constant dense<0.000000e+00> : vector<64x32xf32>
      %17 = tpu.matmul %15, %16, %cst_13 {dimension_numbers = #tpu.dot_dimension_numbers<[1], [0], [0], [1], [0, 0, 1, 1], [], []>} : vector<64x16xf32>, vector<16x32xf32>, vector<64x32xf32> -> vector<64x32xf32>
      %c0_14 = arith.constant 0 : index
      %c0_15 = arith.constant 0 : index
      %18 = vector.load %arg5[%c0_14, %c0_15] : memref<1x32xf32, #tpu.memory_space<vmem>>, vector<1x32xf32>
      %19 = vector.broadcast %18 : vector<1x32xf32> to vector<64x32xf32>
      %20 = arith.addf %17, %19 : vector<64x32xf32>
      %cst_16 = arith.constant 0.000000e+00 : f32
      %21 = vector.broadcast %cst_16 : f32 to vector<64x32xf32>
      %22 = arith.maximumf %20, %21 : vector<64x32xf32>
      %23 = arith.truncf %22 : vector<64x32xf32> to vector<64x32xbf16>
      %c0_17 = arith.constant 0 : index
      %c0_18 = arith.constant 0 : index
      %24 = vector.load %arg6[%c0_17, %c0_18] : memref<64x32xbf16, #tpu.memory_space<vmem>>, vector<64x32xbf16>
      tpu.vector_store %arg6[%c0_17, %c0_18], %23 {strides = array<i32>} : memref<64x32xbf16, #tpu.memory_space<vmem>>, vector<64x32xbf16>,
    } else {
    }
    return
  }
  func.func @transform_0(%arg0: i32, %arg1: i32) -> (i32, i32) {
    %c0_i32 = arith.constant 0 : i32
    return %arg0, %arg1 : i32, i32
  }
  func.func @transform_1(%arg0: i32, %arg1: i32) -> (i32, i32) {
    %c0_i32 = arith.constant 0 : i32
    %c0_i32_0 = arith.constant 0 : i32
    %c0_i32_1 = arith.constant 0 : i32
    return %c0_i32, %c0_i32_0 : i32, i32
  }
  func.func @transform_2(%arg0: i32, %arg1: i32) -> (i32, i32) {
    %c0_i32 = arith.constant 0 : i32
    %c0_i32_0 = arith.constant 0 : i32
    %c0_i32_1 = arith.constant 0 : i32
    return %c0_i32, %c0_i32_0 : i32, i32
  }
  func.func @transform_3(%arg0: i32, %arg1: i32) -> (i32, i32) {
    %c0_i32 = arith.constant 0 : i32
    %c0_i32_0 = arith.constant 0 : i32
    %c0_i32_1 = arith.constant 0 : i32
    return %c0_i32, %c0_i32_0 : i32, i32
  }
  func.func @transform_4(%arg0: i32, %arg1: i32) -> (i32, i32) {
    %c0_i32 = arith.constant 0 : i32
    %c0_i32_0 = arith.constant 0 : i32
    return %arg0, %c0_i32 : i32, i32
  }
}

</mosaic_0001>

<llo_original>
// kernel: tpu_custom_call.1
$region0: #{tpu_custom_call.1}
  #allocation0 [shape = 'u32[]', space=smem, size = 0x4, offset = 0x4, fixed_abs, tag = 'smem constant byte address 0x4 - core index']
  #allocation1 [shape = 'u32[144,128]{1,0:T(1,128)}', space=vmem, size = 0x12000, scoped, tag = 'internal scratch']
  #allocation2 [shape = 'f32[64,16]{1,0:T(8,128)}', space=vmem, size = 0x8000, scoped, tag = 'scratch operand']
  %s0 = inlined_call_operand.vmem [shape: bf16[64,64], index: 0, kind: input, shape index: {}]
  %s1 = inlined_call_operand.vmem [shape: bf16[64,16], index: 1, kind: input, shape index: {}]
  %s2 = inlined_call_operand.hbm [shape: f32[16,32], index: 2, kind: input, shape index: {}]
  %s3 = inlined_call_operand.vmem [shape: f32[1,32], index: 3, kind: input, shape index: {}]
  %s4 = inlined_call_operand.vmem [shape: bf16[64,32], index: 4, kind: output, shape index: {}]
  %s5 = sld [smem:[#allocation0]]
  $region38: #{tpu_custom_call.1} parent=0
    _
  %s7 = ssub.s32 1, %s5
  %s8 = scalar_select 0, %s7, %s5
  $region1: #{tpu_custom_call.1} parent=0
    #allocation3 [shape = 'u8[8192]{0}', space=vmem, size = 0x2000, scoped, tag = 'input window, operand 2, single buffered']
    #allocation4 [shape = 's32[1]{0}', space=sflag, size = 0x4, scoped, tag = 'scoped memory for tpu_custom_call.1']
    %9 = vsyncpa [#allocation4], 0
    // Predicated region
    $region2: #{tpu_custom_call.1} parent=1 // pred_check
      _
    $region3: #{tpu_custom_call.1} parent=1 // pred_check_branch
      %11 = sbr.rel (0) target = $region5
    $region4: #{tpu_custom_call.1} parent=1 // pred_region
      _
    $region5: #{tpu_custom_call.1} parent=1 // pred_fallthru
      _
    // Predicated region
    $region6: #{tpu_custom_call.1} parent=1 // pred_check
      _
    $region7: #{tpu_custom_call.1} parent=1 // pred_check_branch
      %13 = sbr.rel (0) target = $region9
    $region8: #{tpu_custom_call.1} parent=1 // pred_region
      _
    $region9: #{tpu_custom_call.1} parent=1 // pred_fallthru
      _
    // Predicated region
    $region10: #{tpu_custom_call.1} parent=1 // pred_check
      _
    $region11: #{tpu_custom_call.1} parent=1 // pred_check_branch
      %15 = sbr.rel (0) target = $region13
    $region12: #{tpu_custom_call.1} parent=1 // pred_region
      %s17 = ssub.s32 256, 256
      %18 = vsyncadd [#allocation4], %s17
      %s19 = sshll.u32 [#allocation3], 4
      %s20 = int_to_ptr.vmem [resolvable:$true] %s19
      %25 = dma.hbm_to_vmem [thread:$0]  %s2, 256, %s20, [#allocation4], 128, 128, 8
    $region13: #{tpu_custom_call.1} parent=1 // pred_fallthru
      _
    // Predicated region
    $region14: #{tpu_custom_call.1} parent=1 // pred_check
      _
    $region15: #{tpu_custom_call.1} parent=1 // pred_check_branch
      %27 = sbr.rel (0) target = $region17
    $region16: #{tpu_custom_call.1} parent=1 // pred_region
      _
    $region17: #{tpu_custom_call.1} parent=1 // pred_fallthru
      _
    // Predicated region
    $region18: #{tpu_custom_call.1} parent=1 // pred_check
      _
    $region19: #{tpu_custom_call.1} parent=1 // pred_check_branch
      %29 = sbr.rel (0) target = $region21
    $region20: #{tpu_custom_call.1} parent=1 // pred_region
      %30 = dma.done [#allocation4], 256
    $region21: #{tpu_custom_call.1} parent=1 // pred_fallthru
      _
    %p32 = scmp.eq.s32.totalorder 0, 0
    // Predicated region
    $region22: #{tpu_custom_call.1} parent=1 // pred_check
      %p33 = pneg %p32
    $region23: #{tpu_custom_call.1} parent=1 // pred_check_branch
      %35 = sbr.rel (%p33) target = $region25
    $region24: #{tpu_custom_call.1} parent=1 // pred_region
      %vm36 = vcmask 130048
      %37 = vst.msk [vmem:[#allocation2] sm:$0xff] %vm36, 0.0
      %38 = vst.msk [vmem:[#allocation2 + $0x8] sm:$0xff] %vm36, 0.0
      %39 = vst.msk [vmem:[#allocation2 + $0x10] sm:$0xff] %vm36, 0.0
      %40 = vst.msk [vmem:[#allocation2 + $0x18] sm:$0xff] %vm36, 0.0
      %41 = vst.msk [vmem:[#allocation2 + $0x20] sm:$0xff] %vm36, 0.0
      %42 = vst.msk [vmem:[#allocation2 + $0x28] sm:$0xff] %vm36, 0.0
      %43 = vst.msk [vmem:[#allocation2 + $0x30] sm:$0xff] %vm36, 0.0
      %44 = vst.msk [vmem:[#allocation2 + $0x38] sm:$0xff] %vm36, 0.0
    $region25: #{tpu_custom_call.1} parent=1 // pred_fallthru
      _
    %s45 = smul.u32 0, 64
    %s46 = sshra.s32 %s45, 3
    %s47 = sand.u32 %s45, 7
    %s48 = smul.addr %s46, 4
    %s49 = scalar_lea.vmem %s1, %s48
    %v50 = vld [vmem:[%s49] sm:$0xf]
    %v51 = vld [vmem:[%s49 + $0x4] sm:$0xf]
    %v52 = vld [vmem:[%s49 + $0x8] sm:$0xf]
    %v53 = vld [vmem:[%s49 + $0xc] sm:$0xf]
    %v54 = vld [vmem:[%s49 + $0x10] sm:$0xf]
    %v55 = vld [vmem:[%s49 + $0x14] sm:$0xf]
    %v56 = vld [vmem:[%s49 + $0x18] sm:$0xf]
    %v57 = vld [vmem:[%s49 + $0x1c] sm:$0xf]
    %v58 = vld [vmem:[#allocation2] sm:$0xff]
    %v59 = vld [vmem:[#allocation2 + $0x8] sm:$0xff]
    %v60 = vld [vmem:[#allocation2 + $0x10] sm:$0xff]
    %v61 = vld [vmem:[#allocation2 + $0x18] sm:$0xff]
    %v62 = vld [vmem:[#allocation2 + $0x20] sm:$0xff]
    %v63 = vld [vmem:[#allocation2 + $0x28] sm:$0xff]
    %v64 = vld [vmem:[#allocation2 + $0x30] sm:$0xff]
    %v65 = vld [vmem:[#allocation2 + $0x38] sm:$0xff]
    %v66 = vld [vmem:[%s0] sm:$0xf]
    %v67 = vld [vmem:[%s0 + $0x4] sm:$0xf]
    %v68 = vld [vmem:[%s0 + $0x8] sm:$0xf]
    %v69 = vld [vmem:[%s0 + $0xc] sm:$0xf]
    %v70 = vld [vmem:[%s0 + $0x10] sm:$0xf]
    %v71 = vld [vmem:[%s0 + $0x14] sm:$0xf]
    %v72 = vld [vmem:[%s0 + $0x18] sm:$0xf]
    %v73 = vld [vmem:[%s0 + $0x1c] sm:$0xf]
    %v82 = vunpack.c.l.b16 %v66
    %v83 = vunpack.c.l.b16 %v67
    %v84 = vunpack.c.l.b16 %v68
    %v85 = vunpack.c.l.b16 %v69
    %v86 = vunpack.c.l.b16 %v70
    %v87 = vunpack.c.l.b16 %v71
    %v88 = vunpack.c.l.b16 %v72
    %v89 = vunpack.c.l.b16 %v73
    %v90 = vpack.c.b16 %v83, %v82
    %v91 = vpack.c.b16 %v85, %v84
    %v92 = vpack.c.b16 %v87, %v86
    %v93 = vpack.c.b16 %v89, %v88
    %v102 = vunpack.c.l.b16 %v50
    %v103 = vunpack.c.l.b16 %v51
    %v104 = vunpack.c.l.b16 %v52
    %v105 = vunpack.c.l.b16 %v53
    %v106 = vunpack.c.l.b16 %v54
    %v107 = vunpack.c.l.b16 %v55
    %v108 = vunpack.c.l.b16 %v56
    %v109 = vunpack.c.l.b16 %v57
    %v110 = vpack.c.b16 %v103, %v102
    %v111 = vpack.c.b16 %v105, %v104
    %v112 = vpack.c.b16 %v107, %v106
    %v113 = vpack.c.b16 %v109, %v108
    %vm118 = vcmask 523264
    %v120 = vsel %vm118, %v90, 0
    %v123 = vsel %vm118, %v91, 0
    %v126 = vsel %vm118, %v92, 0
    %v129 = vsel %vm118, %v93, 0
    %131 = vmatprep.subr.bf16.mxu0 0
    %132 = vmatpush1.bf16.msra.mxu0 0
    %133 = vmatprep.subr.bf16.mxu0 0
    %134 = vmatpush1.bf16.msra.mxu0 0
    %135 = vmatprep.subr.bf16.mxu0 0
    %136 = vmatpush1.bf16.msra.mxu0 0
    %137 = vmatprep.subr.bf16.mxu0 0
    %138 = vmatpush1.bf16.msra.mxu0 0
    %139 = vmatprep.subr.bf16.mxu0 0
    %140 = vmatpush1.bf16.msra.mxu0 %v113
    %141 = vmatprep.subr.bf16.mxu0 0
    %142 = vmatpush1.bf16.msra.mxu0 %v112
    %143 = vmatprep.subr.bf16.mxu0 0
    %144 = vmatpush1.bf16.msra.mxu0 %v111
    %145 = vmatprep.subr.bf16.mxu0 0
    %146 = vmatpush1.bf16.msra.mxu0 %v110
    %147 = vmatprep.subr.bf16.mxu0 0
    %148 = vmatpush2.bf16.msra.mxu0 0
    %149 = vmatprep.subr.bf16.mxu0 0
    %150 = vmatpush2.bf16.msra.mxu0 0
    %151 = vmatprep.subr.bf16.mxu0 0
    %152 = vmatpush2.bf16.msra.mxu0 0
    %153 = vmatprep.subr.bf16.mxu0 0
    %154 = vmatpush2.bf16.msra.mxu0 0
    %155 = vmatprep.subr.bf16.mxu0 0
    %156 = vmatpush2.bf16.msra.mxu0 0
    %157 = vmatprep.subr.bf16.mxu0 0
    %158 = vmatpush2.bf16.msra.mxu0 0
    %159 = vmatprep.subr.bf16.mxu0 0
    %160 = vmatpush2.bf16.msra.mxu0 0
    %161 = vmatprep.subr.bf16.mxu0 0
    %162 = vmatpush2.bf16.msra.mxu0 0
    %163 = vmatprep.mubr.bf16.mxu0 0
    %164 = vmatmul.mubr.bf16.gmra.mxu0 %v120
    %v165 = vpop.f32.mrf.mxu0
    %v166 = vadd.f32 0.0, %v165
    %v167 = vpop.f32.mrf.mxu0
    %v168 = vpop.f32.mrf.mxu0
    %v169 = vadd.f32 0.0, %v168
    %v170 = vpop.f32.mrf.mxu0
    %171 = vmatprep.mubr.bf16.mxu0 0
    %172 = vmatmul.mubr.bf16.gmra.mxu0 %v123
    %v173 = vpop.f32.mrf.mxu0
    %v174 = vadd.f32 0.0, %v173
    %v175 = vpop.f32.mrf.mxu0
    %v176 = vpop.f32.mrf.mxu0
    %v177 = vadd.f32 0.0, %v176
    %v178 = vpop.f32.mrf.mxu0
    %179 = vmatprep.mubr.bf16.mxu0 0
    %180 = vmatmul.mubr.bf16.gmra.mxu0 %v126
    %v181 = vpop.f32.mrf.mxu0
    %v182 = vadd.f32 0.0, %v181
    %v183 = vpop.f32.mrf.mxu0
    %v184 = vpop.f32.mrf.mxu0
    %v185 = vadd.f32 0.0, %v184
    %v186 = vpop.f32.mrf.mxu0
    %187 = vmatprep.mubr.bf16.mxu0 0
    %188 = vmatmul.mubr.bf16.gmra.mxu0 %v129
    %v189 = vpop.f32.mrf.mxu0
    %v190 = vadd.f32 0.0, %v189
    %v191 = vpop.f32.mrf.mxu0
    %v192 = vpop.f32.mrf.mxu0
    %v193 = vadd.f32 0.0, %v192
    %v194 = vpop.f32.mrf.mxu0
    %195 = vdwg.mxu0
    %v196 = vadd.f32 %v58, %v166
    %v197 = vadd.f32 %v59, %v169
    %v198 = vadd.f32 %v60, %v174
    %v199 = vadd.f32 %v61, %v177
    %v200 = vadd.f32 %v62, %v182
    %v201 = vadd.f32 %v63, %v185
    %v202 = vadd.f32 %v64, %v190
    %v203 = vadd.f32 %v65, %v193
    %vm204 = vcmask 130048
    %205 = vst.msk [vmem:[#allocation2] sm:$0xff] %vm204, %v196
    %206 = vst.msk [vmem:[#allocation2 + $0x8] sm:$0xff] %vm204, %v197
    %207 = vst.msk [vmem:[#allocation2 + $0x10] sm:$0xff] %vm204, %v198
    %208 = vst.msk [vmem:[#allocation2 + $0x18] sm:$0xff] %vm204, %v199
    %209 = vst.msk [vmem:[#allocation2 + $0x20] sm:$0xff] %vm204, %v200
    %210 = vst.msk [vmem:[#allocation2 + $0x28] sm:$0xff] %vm204, %v201
    %211 = vst.msk [vmem:[#allocation2 + $0x30] sm:$0xff] %vm204, %v202
    %212 = vst.msk [vmem:[#allocation2 + $0x38] sm:$0xff] %vm204, %v203
    // Predicated region
    $region26: #{tpu_custom_call.1} parent=1 // pred_check
      %p213 = pneg %p32
    $region27: #{tpu_custom_call.1} parent=1 // pred_check_branch
      %215 = sbr.rel (%p213) target = $region29
    $region28: #{tpu_custom_call.1} parent=1 // pred_region
      %v216 = vld [vmem:[#allocation2] sm:$0xff]
      %v217 = vld [vmem:[#allocation2 + $0x8] sm:$0xff]
      %v218 = vld [vmem:[#allocation2 + $0x10] sm:$0xff]
      %v219 = vld [vmem:[#allocation2 + $0x18] sm:$0xff]
      %v220 = vld [vmem:[#allocation2 + $0x20] sm:$0xff]
      %v221 = vld [vmem:[#allocation2 + $0x28] sm:$0xff]
      %v222 = vld [vmem:[#allocation2 + $0x30] sm:$0xff]
      %v223 = vld [vmem:[#allocation2 + $0x38] sm:$0xff]
      %v224 = vld [vmem:[#allocation3] sm:$0xff]
      %v225 = vld [vmem:[#allocation3 + $0x8] sm:$0xff]
      %v226 = vld [vmem:[%s3] sm:$0x1]
      %v228 = vlaneseq
      %v229 = vshrl.u32 %v228, 7
      %v230 = vsub.s32 0, %v229
      %v231 = vrot.slane %v226, %v230
      %v234 = vsel %vm204, %v216, 0
      %v237 = vsel %vm204, %v217, 0
      %v240 = vsel %vm204, %v218, 0
      %v243 = vsel %vm204, %v219, 0
      %v246 = vsel %vm204, %v220, 0
      %v249 = vsel %vm204, %v221, 0
      %v252 = vsel %vm204, %v222, 0
      %v255 = vsel %vm204, %v223, 0
      %257 = vmatprep.subr.mxu0 0.0
      %258 = vmatpush1.msra.mxu0 0.0
      %259 = vmatprep.subr.mxu0 0.0
      %260 = vmatpush1.msra.mxu0 0.0
      %261 = vmatprep.subr.mxu0 0.0
      %262 = vmatpush1.msra.mxu0 0.0
      %263 = vmatprep.subr.mxu0 0.0
      %264 = vmatpush1.msra.mxu0 0.0
      %265 = vmatprep.subr.mxu0 0.0
      %266 = vmatpush1.msra.mxu0 0.0
      %267 = vmatprep.subr.mxu0 0.0
      %268 = vmatpush1.msra.mxu0 0.0
      %269 = vmatprep.subr.mxu0 0.0
      %270 = vmatpush1.msra.mxu0 0.0
      %271 = vmatprep.subr.mxu0 0.0
      %272 = vmatpush1.msra.mxu0 0.0
      %273 = vmatprep.subr.mxu0 0.0
      %274 = vmatpush1.msra.mxu0 0.0
      %275 = vmatprep.subr.mxu0 0.0
      %276 = vmatpush1.msra.mxu0 0.0
      %277 = vmatprep.subr.mxu0 0.0
      %278 = vmatpush1.msra.mxu0 0.0
      %279 = vmatprep.subr.mxu0 0.0
      %280 = vmatpush1.msra.mxu0 0.0
      %281 = vmatprep.subr.mxu0 0.0
      %282 = vmatpush1.msra.mxu0 0.0
      %283 = vmatprep.subr.mxu0 0.0
      %284 = vmatpush1.msra.mxu0 0.0
      %285 = vmatprep.subr.mxu0 0.0
      %286 = vmatpush1.msra.mxu0 %v225
      %287 = vmatprep.subr.mxu0 0.0
      %288 = vmatpush1.msra.mxu0 %v224
      %289 = vmatprep.subr.mxu0 0.0
      %290 = vmatpush2.msra.mxu0 0.0
      %291 = vmatprep.subr.mxu0 0.0
      %292 = vmatpush2.msra.mxu0 0.0
      %293 = vmatprep.subr.mxu0 0.0
      %294 = vmatpush2.msra.mxu0 0.0
      %295 = vmatprep.subr.mxu0 0.0
      %296 = vmatpush2.msra.mxu0 0.0
      %297 = vmatprep.subr.mxu0 0.0
      %298 = vmatpush2.msra.mxu0 0.0
      %299 = vmatprep.subr.mxu0 0.0
      %300 = vmatpush2.msra.mxu0 0.0
      %301 = vmatprep.subr.mxu0 0.0
      %302 = vmatpush2.msra.mxu0 0.0
      %303 = vmatprep.subr.mxu0 0.0
      %304 = vmatpush2.msra.mxu0 0.0
      %305 = vmatprep.subr.mxu0 0.0
      %306 = vmatpush2.msra.mxu0 0.0
      %307 = vmatprep.subr.mxu0 0.0
      %308 = vmatpush2.msra.mxu0 0.0
      %309 = vmatprep.subr.mxu0 0.0
      %310 = vmatpush2.msra.mxu0 0.0
      %311 = vmatprep.subr.mxu0 0.0
      %312 = vmatpush2.msra.mxu0 0.0
      %313 = vmatprep.subr.mxu0 0.0
      %314 = vmatpush2.msra.mxu0 0.0
      %315 = vmatprep.subr.mxu0 0.0
      %316 = vmatpush2.msra.mxu0 0.0
      %317 = vmatprep.subr.mxu0 0.0
      %318 = vmatpush2.msra.mxu0 0.0
      %319 = vmatprep.subr.mxu0 0.0
      %320 = vmatpush2.msra.mxu0 0.0
      %321 = vmatprep.mubr.f32.mxu0 0.0
      %322 = vmatmul.mubr.f32.gmra.mxu0 %v234
      %v323 = vpop.f32.mrf.mxu0
      %v324 = vadd.f32 %v231, %v323
      %v325 = vpop.f32.mrf.mxu0
      %326 = vmatprep.mubr.f32.mxu0 0.0
      %327 = vmatmul.mubr.f32.gmra.mxu0 %v237
      %v328 = vpop.f32.mrf.mxu0
      %v329 = vadd.f32 %v231, %v328
      %v330 = vpop.f32.mrf.mxu0
      %331 = vmatprep.mubr.f32.mxu0 0.0
      %332 = vmatmul.mubr.f32.gmra.mxu0 %v240
      %v333 = vpop.f32.mrf.mxu0
      %v334 = vadd.f32 %v231, %v333
      %v335 = vpop.f32.mrf.mxu0
      %336 = vmatprep.mubr.f32.mxu0 0.0
      %337 = vmatmul.mubr.f32.gmra.mxu0 %v243
      %v338 = vpop.f32.mrf.mxu0
      %v339 = vadd.f32 %v231, %v338
      %v340 = vpop.f32.mrf.mxu0
      %341 = vmatprep.mubr.f32.mxu0 0.0
      %342 = vmatmul.mubr.f32.gmra.mxu0 %v246
      %v343 = vpop.f32.mrf.mxu0
      %v344 = vadd.f32 %v231, %v343
      %v345 = vpop.f32.mrf.mxu0
      %346 = vmatprep.mubr.f32.mxu0 0.0
      %347 = vmatmul.mubr.f32.gmra.mxu0 %v249
      %v348 = vpop.f32.mrf.mxu0
      %v349 = vadd.f32 %v231, %v348
      %v350 = vpop.f32.mrf.mxu0
      %351 = vmatprep.mubr.f32.mxu0 0.0
      %352 = vmatmul.mubr.f32.gmra.mxu0 %v252
      %v353 = vpop.f32.mrf.mxu0
      %v354 = vadd.f32 %v231, %v353
      %v355 = vpop.f32.mrf.mxu0
      %356 = vmatprep.mubr.f32.mxu0 0.0
      %357 = vmatmul.mubr.f32.gmra.mxu0 %v255
      %v358 = vpop.f32.mrf.mxu0
      %v359 = vadd.f32 %v231, %v358
      %v360 = vpop.f32.mrf.mxu0
      %361 = vdwg.mxu0
      %v362 = vmax.f32 %v324, 0.0
      %v363 = vmax.f32 %v329, 0.0
      %v364 = vmax.f32 %v334, 0.0
      %v365 = vmax.f32 %v339, 0.0
      %v366 = vmax.f32 %v344, 0.0
      %v367 = vmax.f32 %v349, 0.0
      %v368 = vmax.f32 %v354, 0.0
      %v369 = vmax.f32 %v359, 0.0
      %v370 = vpack.c.bf16 %v363, %v362
      %v371 = vpack.c.bf16 %v365, %v364
      %v372 = vpack.c.bf16 %v367, %v366
      %v373 = vpack.c.bf16 %v369, %v368
      %v378 = vunpack.c.l.b16 %v370
      %v379 = vunpack.c.h.b16 %v370
      %v380 = vunpack.c.l.b16 %v371
      %v381 = vunpack.c.h.b16 %v371
      %v382 = vunpack.c.l.b16 %v372
      %v383 = vunpack.c.h.b16 %v372
      %v384 = vunpack.c.l.b16 %v373
      %v385 = vunpack.c.h.b16 %v373
      %v386 = vpack.c.b16 %v378, %v378
      %v387 = vpack.c.b16 %v379, %v379
      %v388 = vpack.c.b16 %v380, %v380
      %v389 = vpack.c.b16 %v381, %v381
      %v390 = vpack.c.b16 %v382, %v382
      %v391 = vpack.c.b16 %v383, %v383
      %v392 = vpack.c.b16 %v384, %v384
      %v393 = vpack.c.b16 %v385, %v385
      %vm402 = vcmask 257024
      %403 = vst.msk [vmem:[%s4] sm:$0xf] %vm402, %v386
      %404 = vst.msk [vmem:[%s4 + $0x4] sm:$0xf] %vm402, %v387
      %405 = vst.msk [vmem:[%s4 + $0x8] sm:$0xf] %vm402, %v388
      %406 = vst.msk [vmem:[%s4 + $0xc] sm:$0xf] %vm402, %v389
      %407 = vst.msk [vmem:[%s4 + $0x10] sm:$0xf] %vm402, %v390
      %408 = vst.msk [vmem:[%s4 + $0x14] sm:$0xf] %vm402, %v391
      %409 = vst.msk [vmem:[%s4 + $0x18] sm:$0xf] %vm402, %v392
      %410 = vst.msk [vmem:[%s4 + $0x1c] sm:$0xf] %vm402, %v393
    $region29: #{tpu_custom_call.1} parent=1 // pred_fallthru
      _
    // Predicated region
    $region30: #{tpu_custom_call.1} parent=1 // pred_check
      _
    $region31: #{tpu_custom_call.1} parent=1 // pred_check_branch
      %412 = sbr.rel (0) target = $region33
    $region32: #{tpu_custom_call.1} parent=1 // pred_region
      _
    $region33: #{tpu_custom_call.1} parent=1 // pred_fallthru
      _
    // Predicated region
    $region34: #{tpu_custom_call.1} parent=1 // pred_check
      _
    $region35: #{tpu_custom_call.1} parent=1 // pred_check_branch
      %414 = sbr.rel (0) target = $region37
    $region36: #{tpu_custom_call.1} parent=1 // pred_region
      _
    $region37: #{tpu_custom_call.1} parent=1 // pred_fallthru
      _
    %415 = vsyncpa [#allocation4], 1

</llo_original>
